<compile_context>
chip_gen: v7x
topology: tpu7x:2x2x1
jax: 0.10.0
libtpu: 0.0.40
codegen_flags: <defaults>
</compile_context>

<pallas_src>
import functools
import math

import numpy as np
import jax
import jax.numpy as jnp
from jax.experimental import pallas as pl
from jax.experimental.pallas import tpu as pltpu


# ---------------------------------------------------------------------------
# Nearest-neighbour resize as a one-hot selection matrix (static, trace time).
# ---------------------------------------------------------------------------

def _nearest_indices(out_size, in_size):
    # PyTorch F.interpolate(mode="nearest") (the default): src = min(floor(dst*in/out), in-1)
    idx = np.floor(np.arange(out_size) * (in_size / out_size)).astype(np.int64)
    return np.minimum(idx, in_size - 1)


def _resize_selection_matrix(out_hw, in_hw):
    """M^T of shape (Hc*Wc, H*W):  pose(Cp, Hc*Wc) @ M^T == nearest-resize -> (Cp, H*W)."""
    H, W = out_hw
    Hc, Wc = in_hw
    ri = _nearest_indices(H, Hc)
    ci = _nearest_indices(W, Wc)
    src = (ri[:, None] * Wc + ci[None, :]).reshape(-1)          # (H*W,) flat source index
    mt = np.zeros((Hc * Wc, H * W), np.float32)                 # exact 0/1 entries
    mt[src, np.arange(H * W)] = 1.0
    return mt


# ---------------------------------------------------------------------------
# Fused kernel: out = W_eff @ x_rgb + b_eff + pose_cropped @ M^T  (per (n, HW-tile))
# ---------------------------------------------------------------------------

def _fusion_kernel(x_ref, w_ref, b_ref, p_ref, mt_ref, o_ref, *, cast_dtype):
    """
    x_ref  : (Cr, T)      RGB features (NCHW, H*W flattened on the lane dim)
    w_ref  : (Cp, Cr)     BN-folded 1x1 conv weight (grid-resident)
    b_ref  : (Cp, 1)      BN-folded bias            (grid-resident)
    p_ref  : (Cp, Hc*Wc)  cropped pose, flattened   (resident per batch element)
    mt_ref : (Hc*Wc, T)   one-hot nearest-resize selection-matrix tile
    o_ref  : (Cp, T)      output tile
    """
    x = x_ref[...]
    if cast_dtype is not None:
        x = x.astype(cast_dtype)                      # in-kernel cast: VPU work hidden under DMA
    proj = jnp.dot(w_ref[...], x, preferred_element_type=jnp.float32)            # MXU
    pose = jnp.dot(p_ref[...], mt_ref[...], preferred_element_type=jnp.float32)  # MXU, exact (0/1)
    o_ref[...] = (proj + b_ref[...] + pose).astype(o_ref.dtype)


def _pick_hw_tile(HW, Cr, Cp, HcWc, *, vmem_budget_bytes=12 << 20, max_block_hw=8192):
    """Largest lane-aligned HW tile whose double-buffered streamed blocks fit the budget."""
    per_col = 2 * (Cr + Cp + HcWc) * 4     # x + out + M^T bytes per lane column, double-buffered
    t = (vmem_budget_bytes // per_col) // 128 * 128
    t = int(max(128, min(t, max_block_hw)))
    return HW if HW <= t else t            # full plane if small; else multiple-of-128 tile


def fused_fusion_forward(x_pose, x_rgb, padding_ratio, w_eff, b_eff, *, mxu_dtype=None):
    """out = Conv1x1(BN(x_rgb)) + nearest_resize(x_pose[:, :, :-pad], (H, W)), fully fused."""
    N, Cr, H, W = x_rgb.shape
    Np, Cp, H_dw, W_dw = x_pose.shape
    assert Np == N and w_eff.shape == (Cp, Cr) and b_eff.shape == (Cp,)
    HW = H * W

    padding_size = int(H_dw * padding_ratio)
    # TODO(synk): PyTorch's `x_pose[:, :, :-0]` (padding_size == 0) yields an empty tensor and
    # the subsequent add errors; like the reference usage we require padding_size > 0.
    if padding_size <= 0:
        raise ValueError(f"padding_size must be > 0 (got {padding_size})")
    Hc, Wc = H_dw - padding_size, W_dw

    if H != H_dw or W != W_dw:             # same (pre-crop) condition as the PyTorch forward
        mt_np = _resize_selection_matrix((H, W), (Hc, Wc))
    else:
        if (Hc, Wc) != (H, W):
            raise ValueError("cropped pose does not match RGB spatial size and no resize is "
                             "triggered (mirrors the PyTorch broadcast error)")
        mt_np = np.eye(HW, dtype=np.float32)
    # TODO(synk): M^T memory scales as (Hc*Wc)*(H*W); fine at feature-map scale, a
    # scalar-prefetched row-table fusion would be needed for very large spatial sizes.
    mt = jnp.asarray(mt_np)
    HcWc = Hc * Wc

    x2 = x_rgb.reshape(N, Cr, HW)                       # free NCHW reshape
    p2 = x_pose[:, :, :Hc, :].reshape(N, Cp, HcWc)      # only the small cropped pose hits HBM
    b2 = b_eff.reshape(Cp, 1).astype(jnp.float32)
    w2 = w_eff.astype(mxu_dtype) if mxu_dtype is not None else w_eff   # tiny, one-off cast
    out_dtype = jnp.result_type(x_rgb.dtype, x_pose.dtype)

    T = _pick_hw_tile(HW, Cr, Cp, HcWc)
    num_t = pl.cdiv(HW, T)                 # ragged last tile is masked by Pallas

    out = pl.pallas_call(
        functools.partial(_fusion_kernel, cast_dtype=mxu_dtype),
        out_shape=jax.ShapeDtypeStruct((N, Cp, HW), out_dtype),
        grid=(N, num_t),
        in_specs=[
            pl.BlockSpec((None, Cr, T), lambda n, t: (n, 0, t)),       # x tile (batch squeezed)
            pl.BlockSpec((Cp, Cr), lambda n, t: (0, 0)),               # folded weight (resident)
            pl.BlockSpec((Cp, 1), lambda n, t: (0, 0)),                # folded bias   (resident)
            pl.BlockSpec((None, Cp, HcWc), lambda n, t: (n, 0, 0)),    # cropped pose (per batch)
            pl.BlockSpec((HcWc, T), lambda n, t: (0, t)),              # resize matrix tile
        ],
        out_specs=pl.BlockSpec((None, Cp, T), lambda n, t: (n, 0, t)),
        compiler_params=pltpu.CompilerParams(
            dimension_semantics=("parallel", "parallel")),
    )(x2, w2, b2, p2, mt)
    return out.reshape(N, Cp, H, W)


# ---------------------------------------------------------------------------
# Module wrapper (eval-mode BN folded into the 1x1 conv at init).
# ---------------------------------------------------------------------------

class FusionPallas:
    """Pallas equivalent of Fusion(channel_pose, channel_rgp, act) in eval mode.

    forward(x_pose, x_rgb, padding_ratio):
        out = Conv1x1(BatchNorm2d(x_rgb)) + nearest_resize(x_pose[:, :, :-pad], (H, W))
    (the `act` constructor argument is unused by the reference forward).
    """
    # TODO(synk): train-mode BatchNorm (batch statistics + running-stat update) is not
    # implemented; eval-mode running-stat BN is folded into the 1x1 conv instead.

    def __init__(self, channel_pose, channel_rgp, key, eps=1e-5):
        self.channel_pose = channel_pose
        self.channel_rgp = channel_rgp
        self.eps = eps
        k1, k2, k3, k4, k5, k6 = jax.random.split(key, 6)
        bound = 1.0 / math.sqrt(channel_rgp)       # PyTorch Conv2d default init range
        # 1x1 conv weight (Cout, Cin, 1, 1) stored squeezed as (Cp, Cr), plus bias.
        self.w = jax.random.uniform(k1, (channel_pose, channel_rgp), jnp.float32, -bound, bound)
        self.b = jax.random.uniform(k2, (channel_pose,), jnp.float32, -bound, bound)
        # BatchNorm2d(channel_rgp) parameters / running stats.
        self.gamma = jax.random.uniform(k3, (channel_rgp,), jnp.float32, 0.5, 1.5)
        self.beta = jax.random.normal(k4, (channel_rgp,), jnp.float32) * 0.1
        self.running_mean = jax.random.normal(k5, (channel_rgp,), jnp.float32) * 0.1
        self.running_var = jax.random.uniform(k6, (channel_rgp,), jnp.float32, 0.5, 1.5)
        # Fold eval-mode BN into the 1x1 conv:
        #   bn(x)       = x * scale + (beta - mean*scale),  scale = gamma / sqrt(var+eps)
        #   conv(bn(x)) = (W*scale) @ x + (b + W @ (beta - mean*scale))
        scale = self.gamma / jnp.sqrt(self.running_var + eps)
        shift = self.beta - self.running_mean * scale
        self.w_eff = self.w * scale[None, :]        # (Cp, Cr)
        self.b_eff = self.b + self.w @ shift        # (Cp,)

    def __call__(self, x_pose, x_rgb, padding_ratio, mxu_dtype=None):
        return fused_fusion_forward(x_pose, x_rgb, padding_ratio,
                                    self.w_eff, self.b_eff, mxu_dtype=mxu_dtype)


# ---------------------------------------------------------------------------
# Pure-JAX reference (mirrors the PyTorch forward, un-folded BN, XLA gathers).
# ---------------------------------------------------------------------------

def crop_and_resize_pose(x_pose, padding_ratio, out_hw):
    N, Cp, H_dw, W_dw = x_pose.shape
    H, W = out_hw
    padding_size = int(H_dw * padding_ratio)
    Hc, Wc = H_dw - padding_size, W_dw
    pose_c = x_pose[:, :, :Hc, :]
    if H != H_dw or W != W_dw:
        ri = _nearest_indices(H, Hc)
        ci = _nearest_indices(W, Wc)
        pose_c = pose_c[:, :, ri, :][:, :, :, ci]
    return pose_c


def fusion_reference(module, x_pose, x_rgb, padding_ratio):
    _, _, H, W = x_rgb.shape
    pose_res = crop_and_resize_pose(x_pose, padding_ratio, (H, W))
    c = lambda v: v[None, :, None, None]
    x_bn = (x_rgb - c(module.running_mean)) / jnp.sqrt(c(module.running_var) + module.eps)
    x_bn = x_bn * c(module.gamma) + c(module.beta)
    proj = jnp.einsum("nchw,kc->nkhw", x_bn, module.w) + c(module.b)
    return proj + pose_res


if __name__ == "__main__":
    key = jax.random.PRNGKey(0)
    N = 2
    channel_pose, channel_rgp = 128, 64   # small but lane-friendly encoder widths
    H, W = 16, 16                         # RGB stream spatial size
    H_dw, W_dw = 10, 10                   # pose stream spatial size (pre-crop)
    padding_ratio = 0.2                   # -> padding_size = 2, cropped pose is 8x10

    key, kmod, kp, kr = jax.random.split(key, 4)
    module = FusionPallas(channel_pose, channel_rgp, kmod)
    x_pose = jax.random.normal(kp, (N, channel_pose, H_dw, W_dw), jnp.float32)
    x_rgb = jax.random.normal(kr, (N, channel_rgp, H, W), jnp.float32)

    ref = jax.block_until_ready(fusion_reference(module, x_pose, x_rgb, padding_ratio))

    # f32 MXU path.
    out = jax.block_until_ready(module(x_pose, x_rgb, padding_ratio))
    assert out.shape == (N, channel_pose, H, W), out.shape
    err_f32 = float(jnp.max(jnp.abs(out - ref)))
    assert err_f32 < 2e-2, f"f32 path max abs err {err_f32}"

    # bf16 MXU path (in-kernel activation cast, f32 accumulate/epilogue).
    out_bf16 = jax.block_until_ready(module(x_pose, x_rgb, padding_ratio,
                                            mxu_dtype=jnp.bfloat16))
    err_bf16 = float(jnp.max(jnp.abs(out_bf16 - ref)))
    assert err_bf16 < 1e-1, f"bf16 path max abs err {err_bf16}"

    print("KERNEL_OK")
</pallas_src>

<mosaic_0001>
module attributes {stable_mosaic.version = 11 : i64} {
  func.func @_fusion_kernel(%arg0: i32, %arg1: i32, %arg2: memref<1x64x256xf32, #tpu.memory_space<vmem>>, %arg3: memref<128x64xf32, #tpu.memory_space<vmem>>, %arg4: memref<128x1xf32, #tpu.memory_space<vmem>>, %arg5: memref<1x128x80xf32, #tpu.memory_space<vmem>>, %arg6: memref<80x256xf32, #tpu.memory_space<vmem>>, %arg7: memref<1x128x256xf32, #tpu.memory_space<vmem>>) attributes {dimension_semantics = [#tpu.dimension_semantics<parallel>, #tpu.dimension_semantics<parallel>], iteration_bounds = array<i64: 2, 1>, scalar_prefetch = 0 : i64, scratch_operands = 0 : i64, tpu.core_type = #tpu.core_type<tc>, window_params = [{transform_indices = @transform_0, window_bounds = array<i64: 1, 64, 256>}, {pipeline_mode = #tpu.pipeline_mode<synchronous>, transform_indices = @transform_1, window_bounds = array<i64: 128, 64>}, {pipeline_mode = #tpu.pipeline_mode<synchronous>, transform_indices = @transform_2, window_bounds = array<i64: 128, 1>}, {transform_indices = @transform_3, window_bounds = array<i64: 1, 128, 80>}, {transform_indices = @transform_4, window_bounds = array<i64: 80, 256>}, {transform_indices = @transform_5, window_bounds = array<i64: 1, 128, 256>}]} {
    %c0 = arith.constant 0 : index
    %c0_0 = arith.constant 0 : index
    %c0_1 = arith.constant 0 : index
    %0 = vector.load %arg2[%c0, %c0_0, %c0_1] : memref<1x64x256xf32, #tpu.memory_space<vmem>>, vector<1x64x256xf32>
    %1 = vector.shape_cast %0 : vector<1x64x256xf32> to vector<64x256xf32>
    %c0_2 = arith.constant 0 : index
    %c0_3 = arith.constant 0 : index
    %2 = vector.load %arg3[%c0_2, %c0_3] : memref<128x64xf32, #tpu.memory_space<vmem>>, vector<128x64xf32>
    %cst = arith.constant dense<0.000000e+00> : vector<128x256xf32>
    %3 = tpu.matmul %2, %1, %cst {dimension_numbers = #tpu.dot_dimension_numbers<[1], [0], [0], [1], [0, 0, 1, 1], [], []>} : vector<128x64xf32>, vector<64x256xf32>, vector<128x256xf32> -> vector<128x256xf32>
    %c0_4 = arith.constant 0 : index
    %c0_5 = arith.constant 0 : index
    %c0_6 = arith.constant 0 : index
    %4 = vector.load %arg5[%c0_4, %c0_5, %c0_6] : memref<1x128x80xf32, #tpu.memory_space<vmem>>, vector<1x128x80xf32>
    %5 = vector.shape_cast %4 : vector<1x128x80xf32> to vector<128x80xf32>
    %c0_7 = arith.constant 0 : index
    %c0_8 = arith.constant 0 : index
    %6 = vector.load %arg6[%c0_7, %c0_8] : memref<80x256xf32, #tpu.memory_space<vmem>>, vector<80x256xf32>
    %cst_9 = arith.constant dense<0.000000e+00> : vector<128x256xf32>
    %7 = tpu.matmul %5, %6, %cst_9 {dimension_numbers = #tpu.dot_dimension_numbers<[1], [0], [0], [1], [0, 0, 1, 1], [], []>} : vector<128x80xf32>, vector<80x256xf32>, vector<128x256xf32> -> vector<128x256xf32>
    %c0_10 = arith.constant 0 : index
    %c0_11 = arith.constant 0 : index
    %8 = vector.load %arg4[%c0_10, %c0_11] : memref<128x1xf32, #tpu.memory_space<vmem>>, vector<128x1xf32>
    %9 = vector.broadcast %8 : vector<128x1xf32> to vector<128x256xf32>
    %10 = arith.addf %3, %9 : vector<128x256xf32>
    %11 = arith.addf %10, %7 : vector<128x256xf32>
    %c0_12 = arith.constant 0 : index
    %c0_13 = arith.constant 0 : index
    %c0_14 = arith.constant 0 : index
    %12 = vector.load %arg7[%c0_12, %c0_13, %c0_14] : memref<1x128x256xf32, #tpu.memory_space<vmem>>, vector<1x128x256xf32>
    %13 = vector.shape_cast %12 : vector<1x128x256xf32> to vector<128x256xf32>
    %14 = vector.shape_cast %11 : vector<128x256xf32> to vector<1x128x256xf32>
    tpu.vector_store %arg7[%c0_12, %c0_13, %c0_14], %14 {strides = array<i32>} : memref<1x128x256xf32, #tpu.memory_space<vmem>>, vector<1x128x256xf32>,
    return
  }
  func.func @transform_0(%arg0: i32, %arg1: i32) -> (i32, i32, i32) {
    %c0_i32 = arith.constant 0 : i32
    %c0_i32_0 = arith.constant 0 : i32
    return %arg0, %c0_i32, %arg1 : i32, i32, i32
  }
  func.func @transform_1(%arg0: i32, %arg1: i32) -> (i32, i32) {
    %c0_i32 = arith.constant 0 : i32
    %c0_i32_0 = arith.constant 0 : i32
    %c0_i32_1 = arith.constant 0 : i32
    return %c0_i32, %c0_i32_0 : i32, i32
  }
  func.func @transform_2(%arg0: i32, %arg1: i32) -> (i32, i32) {
    %c0_i32 = arith.constant 0 : i32
    %c0_i32_0 = arith.constant 0 : i32
    %c0_i32_1 = arith.constant 0 : i32
    return %c0_i32, %c0_i32_0 : i32, i32
  }
  func.func @transform_3(%arg0: i32, %arg1: i32) -> (i32, i32, i32) {
    %c0_i32 = arith.constant 0 : i32
    %c0_i32_0 = arith.constant 0 : i32
    %c0_i32_1 = arith.constant 0 : i32
    return %arg0, %c0_i32, %c0_i32_0 : i32, i32, i32
  }
  func.func @transform_4(%arg0: i32, %arg1: i32) -> (i32, i32) {
    %c0_i32 = arith.constant 0 : i32
    %c0_i32_0 = arith.constant 0 : i32
    return %c0_i32, %arg1 : i32, i32
  }
  func.func @transform_5(%arg0: i32, %arg1: i32) -> (i32, i32, i32) {
    %c0_i32 = arith.constant 0 : i32
    %c0_i32_0 = arith.constant 0 : i32
    return %arg0, %c0_i32, %arg1 : i32, i32, i32
  }
}

</mosaic_0001>

<llo_original>
// kernel: tpu_custom_call.1
$region0: #{tpu_custom_call.1}
  #allocation0 [shape = 'u32[]', space=smem, size = 0x4, offset = 0x4, fixed_abs, tag = 'smem constant byte address 0x4 - core index']
  #allocation1 [shape = 'u32[144,128]{1,0:T(1,128)}', space=vmem, size = 0x12000, scoped, tag = 'internal scratch']
  %s0 = inlined_call_operand.vmem [shape: f32[2,64,256], index: 0, kind: input, shape index: {}]
  %s1 = inlined_call_operand.vmem [shape: f32[128,64], index: 1, kind: input, shape index: {}]
  %s2 = inlined_call_operand.vmem [shape: f32[128,1], index: 2, kind: input, shape index: {}]
  %s3 = inlined_call_operand.vmem [shape: f32[2,128,80], index: 3, kind: input, shape index: {}]
  %s4 = inlined_call_operand.vmem [shape: f32[80,256], index: 4, kind: input, shape index: {}]
  %s5 = inlined_call_operand.hbm [shape: f32[2,128,256], index: 5, kind: output, shape index: {}]
  %s6 = sld [smem:[#allocation0]]
  $region53: #{tpu_custom_call.1} parent=0
    _
  %s8 = ssub.s32 1, %s6
  %s9 = scalar_select 0, %s8, %s6
  $region1: #{tpu_custom_call.1} parent=0
    #allocation2 [shape = 'u8[262144]{0}', space=vmem, size = 0x40000, scoped, tag = 'output window, operand 0']
    #allocation3 [shape = 's32[2]{0}', space=sflag, size = 0x8, scoped, tag = 'scoped memory for tpu_custom_call.1']
    %10 = vsyncpa [#allocation3], 0
    %s11 = scalar_lea.sflag [#allocation3], 1
    %12 = vsyncpa %s11, 0
    loop: start=0, step=1, limit=4
    $region2: #{tpu_custom_call.1} parent=1 // loop_pre_header
      _
    $region3: #{tpu_custom_call.1} parent=1 // loop_header
      %s14 = sphi 0, %s18
      %p15 = scmp.ge.s32.totalorder %s14, 4
      %s21 = sphi 0, %s33
      %s22 = sphi 0, %s29
      %s23 = sphi 0, %s21
      %s24 = sphi 0, %s22
      %s25 = sphi 0, %s23
      %s26 = sphi 0, %s24
      %s38 = sphi 0, %s40
      %s41 = sphi 0, %s38
      %s42 = sphi 0, %s41
      %s58 = sphi 0, %s42
      %s62 = sphi 0, %s62
      %s64 = sphi 0, %s62
      %s65 = sphi 0, %s64
      %s79 = sphi 0, %s65
      %s83 = sphi 0, %s83
      %s85 = sphi 0, %s83
      %s86 = sphi 0, %s85
      %s100 = sphi 0, %s86
      %s106 = sphi 0, %s108
      %s109 = sphi 0, %s106
      %s110 = sphi 0, %s109
      %s126 = sphi 0, %s110
      %s132 = sphi 0, %s134
      %s135 = sphi 0, %s132
      %s136 = sphi 0, %s135
      %s152 = sphi 0, %s136
      %s160 = sphi 0, %s162
      %s163 = sphi 0, %s160
      %s164 = sphi 0, %s163
      %s180 = sphi 0, %s164
    $region4: #{tpu_custom_call.1} parent=1 // loop_header_branch
      %17 = sbr.rel (%p15) target = $region8
    $region5: #{tpu_custom_call.1} parent=1 // loop_body
      %s19 = ssub.s32 %s14, 1
      %s20 = ssub.s32 %s14, 2
      %s27 = sadd.s32 1, %s22
      %p28 = scmp.ge.s32.totalorder %s27, 1
      %s29 = scalar_select %p28, 0, %s27
      %s30 = sadd.s32 1, %s21
      %s31 = scalar_select %p28, %s30, %s21
      %p32 = scmp.ge.s32.totalorder %s31, 2
      %s33 = scalar_select %p32, 0, %s31
      %s34 = ssub.s32 %s21, %s33
      %s35 = ssub.s32 %s22, %s29
      %s36 = sor.u32 %s34, %s35
      %p37 = scmp.eq.s32.totalorder %s36, 0
      %s39 = sadd.s32 %s38, 1
      %s40 = scalar_select %p37, %s38, %s39
      %p43 = pneg %p37
      %p44 = scmp.eq.s32.totalorder %s14, 1
      %p45 = por %p43, %p44
      %p46 = scmp.ne.s32.totalorder %s38, %s41
      %p47 = scmp.eq.s32.totalorder %s14, 0
      %p48 = por %p46, %p47
      %p49 = scmp.ne.s32.totalorder %s38, %s41
      %p50 = scmp.eq.s32.totalorder %s19, 1
      %p51 = por %p49, %p50
      %p52 = scmp.ne.s32.totalorder %s41, %s42
      %p53 = scmp.eq.s32.totalorder %s19, 0
      %p54 = por %p52, %p53
      %p55 = scmp.ne.s32.totalorder %s41, %s42
      %p56 = scmp.eq.s32.totalorder %s20, 1
      %p57 = por %p55, %p56
      %p59 = scmp.ne.s32.totalorder %s42, %s58
      %p60 = scmp.eq.s32.totalorder %s20, 0
      %p61 = por %p59, %p60
      %s63 = sadd.s32 %s62, 1
      %p66 = scmp.eq.s32.totalorder %s14, 1
      %p67 = scmp.ne.s32.totalorder %s62, %s64
      %p68 = scmp.eq.s32.totalorder %s14, 0
      %p69 = por %p67, %p68
      %p70 = scmp.ne.s32.totalorder %s62, %s64
      %p71 = scmp.eq.s32.totalorder %s19, 1
      %p72 = por %p70, %p71
      %p73 = scmp.ne.s32.totalorder %s64, %s65
      %p74 = scmp.eq.s32.totalorder %s19, 0
      %p75 = por %p73, %p74
      %p76 = scmp.ne.s32.totalorder %s64, %s65
      %p77 = scmp.eq.s32.totalorder %s20, 1
      %p78 = por %p76, %p77
      %p80 = scmp.ne.s32.totalorder %s65, %s79
      %p81 = scmp.eq.s32.totalorder %s20, 0
      %p82 = por %p80, %p81
      %s84 = sadd.s32 %s83, 1
      %p87 = scmp.eq.s32.totalorder %s14, 1
      %p88 = scmp.ne.s32.totalorder %s83, %s85
      %p89 = scmp.eq.s32.totalorder %s14, 0
      %p90 = por %p88, %p89
      %p91 = scmp.ne.s32.totalorder %s83, %s85
      %p92 = scmp.eq.s32.totalorder %s19, 1
      %p93 = por %p91, %p92
      %p94 = scmp.ne.s32.totalorder %s85, %s86
      %p95 = scmp.eq.s32.totalorder %s19, 0
      %p96 = por %p94, %p95
      %p97 = scmp.ne.s32.totalorder %s85, %s86
      %p98 = scmp.eq.s32.totalorder %s20, 1
      %p99 = por %p97, %p98
      %p101 = scmp.ne.s32.totalorder %s86, %s100
      %p102 = scmp.eq.s32.totalorder %s20, 0
      %p103 = por %p101, %p102
      %s104 = ssub.s32 %s21, %s33
      %p105 = scmp.eq.s32.totalorder %s104, 0
      %s107 = sadd.s32 %s106, 1
      %s108 = scalar_select %p105, %s106, %s107
      %p111 = pneg %p105
      %p112 = scmp.eq.s32.totalorder %s14, 1
      %p113 = por %p111, %p112
      %p114 = scmp.ne.s32.totalorder %s106, %s109
      %p115 = scmp.eq.s32.totalorder %s14, 0
      %p116 = por %p114, %p115
      %p117 = scmp.ne.s32.totalorder %s106, %s109
      %p118 = scmp.eq.s32.totalorder %s19, 1
      %p119 = por %p117, %p118
      %p120 = scmp.ne.s32.totalorder %s109, %s110
      %p121 = scmp.eq.s32.totalorder %s19, 0
      %p122 = por %p120, %p121
      %p123 = scmp.ne.s32.totalorder %s109, %s110
      %p124 = scmp.eq.s32.totalorder %s20, 1
      %p125 = por %p123, %p124
      %p127 = scmp.ne.s32.totalorder %s110, %s126
      %p128 = scmp.eq.s32.totalorder %s20, 0
      %p129 = por %p127, %p128
      %s130 = ssub.s32 %s22, %s29
      %p131 = scmp.eq.s32.totalorder %s130, 0
      %s133 = sadd.s32 %s132, 1
      %s134 = scalar_select %p131, %s132, %s133
      %p137 = pneg %p131
      %p138 = scmp.eq.s32.totalorder %s14, 1
      %p139 = por %p137, %p138
      %p140 = scmp.ne.s32.totalorder %s132, %s135
      %p141 = scmp.eq.s32.totalorder %s14, 0
      %p142 = por %p140, %p141
      %p143 = scmp.ne.s32.totalorder %s132, %s135
      %p144 = scmp.eq.s32.totalorder %s19, 1
      %p145 = por %p143, %p144
      %p146 = scmp.ne.s32.totalorder %s135, %s136
      %p147 = scmp.eq.s32.totalorder %s19, 0
      %p148 = por %p146, %p147
      %p149 = scmp.ne.s32.totalorder %s135, %s136
      %p150 = scmp.eq.s32.totalorder %s20, 1
      %p151 = por %p149, %p150
      %p153 = scmp.ne.s32.totalorder %s136, %s152
      %p154 = scmp.eq.s32.totalorder %s20, 0
      %p155 = por %p153, %p154
      %s156 = ssub.s32 %s21, %s33
      %s157 = ssub.s32 %s22, %s29
      %s158 = sor.u32 %s156, %s157
      %p159 = scmp.eq.s32.totalorder %s158, 0
      %s161 = sadd.s32 %s160, 1
      %s162 = scalar_select %p159, %s160, %s161
      %p165 = pneg %p159
      %p166 = scmp.eq.s32.totalorder %s14, 1
      %p167 = por %p165, %p166
      %p168 = scmp.ne.s32.totalorder %s160, %s163
      %p169 = scmp.eq.s32.totalorder %s14, 0
      %p170 = por %p168, %p169
      %p171 = scmp.ne.s32.totalorder %s160, %s163
      %p172 = scmp.eq.s32.totalorder %s19, 1
      %p173 = por %p171, %p172
      %p174 = scmp.ne.s32.totalorder %s163, %s164
      %p175 = scmp.eq.s32.totalorder %s19, 0
      %p176 = por %p174, %p175
      %p177 = scmp.ne.s32.totalorder %s163, %s164
      %p178 = scmp.eq.s32.totalorder %s20, 1
      %p179 = por %p177, %p178
      %p181 = scmp.ne.s32.totalorder %s164, %s180
      %p182 = scmp.eq.s32.totalorder %s20, 0
      %p183 = por %p181, %p182
      %p184 = scmp.le.s32.totalorder 1, %s14
      %p185 = scmp.lt.s32.totalorder %s14, 3
      %p186 = pnand %p184, %p185
      %p187 = pneg %p186
      // Predicated region
      $region9: #{tpu_custom_call.1} parent=5 // pred_check
        _
      $region10: #{tpu_custom_call.1} parent=5 // pred_check_branch
        %189 = sbr.rel (%p186) target = $region12
      $region11: #{tpu_custom_call.1} parent=5 // pred_region
        %s190 = ssub.s32 %s14, 1
        // Predicated region
        $region13: #{tpu_custom_call.1} parent=11 // pred_check
          %p191 = pneg %p75
        $region14: #{tpu_custom_call.1} parent=11 // pred_check_branch
          %193 = sbr.rel (%p191) target = $region16
        $region15: #{tpu_custom_call.1} parent=11 // pred_region
          _
        $region16: #{tpu_custom_call.1} parent=11 // pred_fallthru
          _
        // Predicated region
        $region17: #{tpu_custom_call.1} parent=11 // pred_check
          %p194 = pneg %p96
        $region18: #{tpu_custom_call.1} parent=11 // pred_check_branch
          %196 = sbr.rel (%p194) target = $region20
        $region19: #{tpu_custom_call.1} parent=11 // pred_region
          _
        $region20: #{tpu_custom_call.1} parent=11 // pred_fallthru
          _
        // Predicated region
        $region21: #{tpu_custom_call.1} parent=11 // pred_check
          %p197 = pneg %p148
        $region22: #{tpu_custom_call.1} parent=11 // pred_check_branch
          %199 = sbr.rel (%p197) target = $region24
        $region23: #{tpu_custom_call.1} parent=11 // pred_region
          %s200 = smul.u32 2, %s24
          %p201 = scmp.lt.s32.totalorder %s200, 1
          %s202 = scalar_select %p201, %s200, 1
          %s203 = smul.addr %s202, 8
          %s204 = scalar_lea.vmem %s4, %s203
          %s205 = smul.u32 2, %s24
        $region24: #{tpu_custom_call.1} parent=11 // pred_fallthru
          _
      $region12: #{tpu_custom_call.1} parent=5 // pred_fallthru
        _
      %p206 = scmp.lt.s32.totalorder %s14, 2
      // Predicated region
      $region25: #{tpu_custom_call.1} parent=5 // pred_check
        %p207 = pneg %p206
      $region26: #{tpu_custom_call.1} parent=5 // pred_check_branch
        %209 = sbr.rel (%p207) target = $region28
      $region27: #{tpu_custom_call.1} parent=5 // pred_region
        // Predicated region
        $region29: #{tpu_custom_call.1} parent=27 // pred_check
          %p210 = pneg %p48
        $region30: #{tpu_custom_call.1} parent=27 // pred_check_branch
          %212 = sbr.rel (%p210) target = $region32
        $region31: #{tpu_custom_call.1} parent=27 // pred_region
          %s213 = smul.u32 2, %s22
          %p214 = scmp.lt.s32.totalorder %s21, 1
          %s215 = scalar_select %p214, %s21, 1
          %p216 = scmp.lt.s32.totalorder %s213, 1
          %s217 = scalar_select %p216, %s213, 1
          %s218 = smul.addr %s215, 16
          %s219 = sadd.s32 %s217, %s218
          %s220 = smul.addr %s219, 8
          %s221 = scalar_lea.vmem %s0, %s220
          %s222 = smul.u32 2, %s22
        $region32: #{tpu_custom_call.1} parent=27 // pred_fallthru
          _
        // Predicated region
        $region33: #{tpu_custom_call.1} parent=27 // pred_check
          %p223 = pneg %p116
        $region34: #{tpu_custom_call.1} parent=27 // pred_check_branch
          %225 = sbr.rel (%p223) target = $region36
        $region35: #{tpu_custom_call.1} parent=27 // pred_region
          %p226 = scmp.lt.s32.totalorder %s21, 1
          %s227 = scalar_select %p226, %s21, 1
          %s228 = smul.addr %s227, 16
          %s229 = smul.addr %s228, 8
          %s230 = scalar_lea.vmem %s3, %s229
        $region36: #{tpu_custom_call.1} parent=27 // pred_fallthru
          _
      $region28: #{tpu_custom_call.1} parent=5 // pred_fallthru
        _
      %p231 = scmp.le.s32.totalorder 1, %s14
      %p232 = scmp.lt.s32.totalorder %s14, 3
      %p233 = pnand %p231, %p232
      %p234 = pneg %p233
      // Predicated region
      $region37: #{tpu_custom_call.1} parent=5 // pred_check
        _
      $region38: #{tpu_custom_call.1} parent=5 // pred_check_branch
        %236 = sbr.rel (%p233) target = $region40
      $region39: #{tpu_custom_call.1} parent=5 // pred_region
        %s237 = ssub.s32 %s14, 1
        %s238 = smul.u32 2, %s24
        %p239 = scmp.lt.s32.totalorder %s23, 1
        %s240 = scalar_select %p239, %s23, 1
        %p241 = scmp.lt.s32.totalorder %s238, 1
        %s242 = scalar_select %p241, %s238, 1
        %s243 = smul.addr %s240, 16
        %s244 = sadd.s32 %s242, %s243
        %s245 = smul.addr %s244, 8
        %s246 = scalar_lea.vmem %s0, %s245
        %p247 = pneg %p54
        %p248 = pneg %p51
        %p249 = pneg %p75
        %p250 = pneg %p72
        %p251 = pneg %p96
        %p252 = pneg %p93
        %p253 = scmp.lt.s32.totalorder %s23, 1
        %s254 = scalar_select %p253, %s23, 1
        %s255 = smul.addr %s254, 16
        %s256 = smul.addr %s255, 8
        %s257 = scalar_lea.vmem %s3, %s256
        %p258 = pneg %p122
        %p259 = pneg %p119
        %s260 = smul.u32 2, %s24
        %p261 = scmp.lt.s32.totalorder %s260, 1
        %s262 = scalar_select %p261, %s260, 1
        %s263 = smul.addr %s262, 8
        %s264 = scalar_lea.vmem %s4, %s263
        %p265 = pneg %p148
        %p266 = pneg %p145
        %p267 = pneg %p176
        %p268 = pneg %p173
        %s269 = sand.u32 %s163, 1
        %s270 = scalar_lea.sflag [#allocation3], %s269
        %s271 = sand.u32 %s163, 1
        %s272 = smul.addr %s271, 256
        %s273 = scalar_lea.vmem [#allocation2], %s272
        %s274 = smul.u32 2, %s24
        %p275 = scmp.lt.s32.totalorder %s23, 1
        %s276 = scalar_select %p275, %s23, 1
        %p277 = scmp.lt.s32.totalorder %s274, 1
        %s278 = scalar_select %p277, %s274, 1
        %s279 = smul.addr %s276, 16
        %s280 = sadd.s32 %s278, %s279
        %s281 = smul.addr %s280, 8
        %s282 = scalar_lea.vmem %s0, %s281
        %s283 = smul.u32 2, %s24
        %p284 = scmp.lt.s32.totalorder %s23, 1
        %s285 = scalar_select %p284, %s23, 1
        %s286 = smul.addr %s285, 16
        %s287 = smul.addr %s286, 8
        %s288 = scalar_lea.vmem %s3, %s287
        %s289 = smul.u32 2, %s24
        %p290 = scmp.lt.s32.totalorder %s289, 1
        %s291 = scalar_select %p290, %s289, 1
        %s292 = smul.addr %s291, 8
        %s293 = scalar_lea.vmem %s4, %s292
        %s294 = smul.u32 2, %s24
        %s295 = smul.u32 2, %s24
        %v296 = vld [vmem:[%s282] sm:$0xff]
        %v297 = vld [vmem:[%s282 + $0x8] sm:$0xff]
        %v298 = vld [vmem:[%s282 + $0x10] sm:$0xff]
        %v299 = vld [vmem:[%s282 + $0x18] sm:$0xff]
        %v300 = vld [vmem:[%s282 + $0x20] sm:$0xff]
        %v301 = vld [vmem:[%s282 + $0x28] sm:$0xff]
        %v302 = vld [vmem:[%s282 + $0x30] sm:$0xff]
        %v303 = vld [vmem:[%s282 + $0x38] sm:$0xff]
        %v304 = vld [vmem:[%s282 + $0x40] sm:$0xff]
        %v305 = vld [vmem:[%s282 + $0x48] sm:$0xff]
        %v306 = vld [vmem:[%s282 + $0x50] sm:$0xff]
        %v307 = vld [vmem:[%s282 + $0x58] sm:$0xff]
        %v308 = vld [vmem:[%s282 + $0x60] sm:$0xff]
        %v309 = vld [vmem:[%s282 + $0x68] sm:$0xff]
        %v310 = vld [vmem:[%s282 + $0x70] sm:$0xff]
        %v311 = vld [vmem:[%s282 + $0x78] sm:$0xff]
        %v312 = vld [vmem:[%s1] sm:$0xff]
        %v313 = vld [vmem:[%s1 + $0x8] sm:$0xff]
        %v314 = vld [vmem:[%s1 + $0x10] sm:$0xff]
        %v315 = vld [vmem:[%s1 + $0x18] sm:$0xff]
        %v316 = vld [vmem:[%s1 + $0x20] sm:$0xff]
        %v317 = vld [vmem:[%s1 + $0x28] sm:$0xff]
        %v318 = vld [vmem:[%s1 + $0x30] sm:$0xff]
        %v319 = vld [vmem:[%s1 + $0x38] sm:$0xff]
        %v320 = vld [vmem:[%s1 + $0x40] sm:$0xff]
        %v321 = vld [vmem:[%s1 + $0x48] sm:$0xff]
        %v322 = vld [vmem:[%s1 + $0x50] sm:$0xff]
        %v323 = vld [vmem:[%s1 + $0x58] sm:$0xff]
        %v324 = vld [vmem:[%s1 + $0x60] sm:$0xff]
        %v325 = vld [vmem:[%s1 + $0x68] sm:$0xff]
        %v326 = vld [vmem:[%s1 + $0x70] sm:$0xff]
        %v327 = vld [vmem:[%s1 + $0x78] sm:$0xff]
        %v328 = vld [vmem:[%s288] sm:$0xff]
        %v329 = vld [vmem:[%s288 + $0x8] sm:$0xff]
        %v330 = vld [vmem:[%s288 + $0x10] sm:$0xff]
        %v331 = vld [vmem:[%s288 + $0x18] sm:$0xff]
        %v332 = vld [vmem:[%s288 + $0x20] sm:$0xff]
        %v333 = vld [vmem:[%s288 + $0x28] sm:$0xff]
        %v334 = vld [vmem:[%s288 + $0x30] sm:$0xff]
        %v335 = vld [vmem:[%s288 + $0x38] sm:$0xff]
        %v336 = vld [vmem:[%s288 + $0x40] sm:$0xff]
        %v337 = vld [vmem:[%s288 + $0x48] sm:$0xff]
        %v338 = vld [vmem:[%s288 + $0x50] sm:$0xff]
        %v339 = vld [vmem:[%s288 + $0x58] sm:$0xff]
        %v340 = vld [vmem:[%s288 + $0x60] sm:$0xff]
        %v341 = vld [vmem:[%s288 + $0x68] sm:$0xff]
        %v342 = vld [vmem:[%s288 + $0x70] sm:$0xff]
        %v343 = vld [vmem:[%s288 + $0x78] sm:$0xff]
        %v344 = vld [vmem:[%s293] sm:$0xff]
        %v345 = vld [vmem:[%s293 + $0x8] sm:$0xff]
        %v346 = vld [vmem:[%s293 + $0x10] sm:$0xff]
        %v347 = vld [vmem:[%s293 + $0x18] sm:$0xff]
        %v348 = vld [vmem:[%s293 + $0x20] sm:$0xff]
        %v349 = vld [vmem:[%s293 + $0x28] sm:$0xff]
        %v350 = vld [vmem:[%s293 + $0x30] sm:$0xff]
        %v351 = vld [vmem:[%s293 + $0x38] sm:$0xff]
        %v352 = vld [vmem:[%s293 + $0x40] sm:$0xff]
        %v353 = vld [vmem:[%s293 + $0x48] sm:$0xff]
        %v354 = vld [vmem:[%s293 + $0x50] sm:$0xff]
        %v355 = vld [vmem:[%s293 + $0x58] sm:$0xff]
        %v356 = vld [vmem:[%s293 + $0x60] sm:$0xff]
        %v357 = vld [vmem:[%s293 + $0x68] sm:$0xff]
        %v358 = vld [vmem:[%s293 + $0x70] sm:$0xff]
        %v359 = vld [vmem:[%s293 + $0x78] sm:$0xff]
        %v360 = vld [vmem:[%s293 + $0x80] sm:$0xff]
        %v361 = vld [vmem:[%s293 + $0x88] sm:$0xff]
        %v362 = vld [vmem:[%s293 + $0x90] sm:$0xff]
        %v363 = vld [vmem:[%s293 + $0x98] sm:$0xff]
        %vm364 = vcmask 654336
        %v366 = vsel %vm364, %v328, 0
        %v369 = vsel %vm364, %v329, 0
        %v372 = vsel %vm364, %v330, 0
        %v375 = vsel %vm364, %v331, 0
        %v378 = vsel %vm364, %v332, 0
        %v381 = vsel %vm364, %v333, 0
        %v384 = vsel %vm364, %v334, 0
        %v387 = vsel %vm364, %v335, 0
        %v390 = vsel %vm364, %v336, 0
        %v393 = vsel %vm364, %v337, 0
        %v396 = vsel %vm364, %v338, 0
        %v399 = vsel %vm364, %v339, 0
        %v402 = vsel %vm364, %v340, 0
        %v405 = vsel %vm364, %v341, 0
        %v408 = vsel %vm364, %v342, 0
        %v411 = vsel %vm364, %v343, 0
        %413 = vmatprep.subr.mxu0 %v345
        %414 = vmatpush1.msra.mxu0 %v344
        %415 = vmatprep.subr.mxu0 %v347
        %416 = vmatpush1.msra.mxu0 %v346
        %417 = vmatprep.subr.mxu0 %v349
        %418 = vmatpush1.msra.mxu0 %v348
        %419 = vmatprep.subr.mxu0 %v351
        %420 = vmatpush1.msra.mxu0 %v350
        %421 = vmatprep.subr.mxu0 %v353
        %422 = vmatpush1.msra.mxu0 %v352
        %423 = vmatprep.subr.mxu0 %v355
        %424 = vmatpush1.msra.mxu0 %v354
        %425 = vmatprep.subr.mxu0 %v357
        %426 = vmatpush1.msra.mxu0 %v356
        %427 = vmatprep.subr.mxu0 %v359
        %428 = vmatpush1.msra.mxu0 %v358
        %429 = vmatprep.subr.mxu0 %v361
        %430 = vmatpush1.msra.mxu0 %v360
        %431 = vmatprep.subr.mxu0 %v363
        %432 = vmatpush1.msra.mxu0 %v362
        %433 = vmatprep.subr.mxu0 0.0
        %434 = vmatpush1.msra.mxu0 0.0
        %435 = vmatprep.subr.mxu0 0.0
        %436 = vmatpush1.msra.mxu0 0.0
        %437 = vmatprep.subr.mxu0 0.0
        %438 = vmatpush1.msra.mxu0 0.0
        %439 = vmatprep.subr.mxu0 0.0
        %440 = vmatpush1.msra.mxu0 0.0
        %441 = vmatprep.subr.mxu0 0.0
        %442 = vmatpush1.msra.mxu0 0.0
        %443 = vmatprep.subr.mxu0 0.0
        %444 = vmatpush1.msra.mxu0 0.0
        %445 = vmatprep.subr.mxu0 0.0
        %446 = vmatpush1.msra.mxu0 0.0
        %447 = vmatprep.subr.mxu0 0.0
        %448 = vmatpush1.msra.mxu0 0.0
        %449 = vmatprep.subr.mxu0 0.0
        %450 = vmatpush1.msra.mxu0 0.0
        %451 = vmatprep.subr.mxu0 0.0
        %452 = vmatpush1.msra.mxu0 0.0
        %453 = vmatprep.subr.mxu0 0.0
        %454 = vmatpush1.msra.mxu0 0.0
        %455 = vmatprep.subr.mxu0 0.0
        %456 = vmatpush1.msra.mxu0 0.0
        %457 = vmatprep.subr.mxu0 0.0
        %458 = vmatpush1.msra.mxu0 0.0
        %459 = vmatprep.subr.mxu0 0.0
        %460 = vmatpush1.msra.mxu0 0.0
        %461 = vmatprep.subr.mxu0 0.0
        %462 = vmatpush1.msra.mxu0 0.0
        %463 = vmatprep.subr.mxu0 0.0
        %464 = vmatpush1.msra.mxu0 0.0
        %465 = vmatprep.subr.mxu0 0.0
        %466 = vmatpush1.msra.mxu0 0.0
        %467 = vmatprep.subr.mxu0 0.0
        %468 = vmatpush1.msra.mxu0 0.0
        %469 = vmatprep.subr.mxu0 0.0
        %470 = vmatpush1.msra.mxu0 0.0
        %471 = vmatprep.subr.mxu0 0.0
        %472 = vmatpush1.msra.mxu0 0.0
        %473 = vmatprep.subr.mxu0 0.0
        %474 = vmatpush1.msra.mxu0 0.0
        %475 = vmatprep.subr.mxu0 0.0
        %476 = vmatpush1.msra.mxu0 0.0
        %477 = vmatprep.mubr.f32.mxu0 0.0
        %478 = vmatmul.mubr.f32.gmra.mrb[0].mxu0 %v366
        %v479 = vpop.f32.mrb[0].mxu0
        %v480 = vadd.f32 0.0, %v479
        %v481 = vpop.f32.mrb[0].mxu0
        %v482 = vadd.f32 0.0, %v481
        %483 = vmatprep.mubr.f32.mxu0 0.0
        %484 = vmatmul.mubr.f32.gmra.mrb[0].mxu0 %v369
        %v485 = vpop.f32.mrb[0].mxu0
        %v486 = vadd.f32 0.0, %v485
        %v487 = vpop.f32.mrb[0].mxu0
        %v488 = vadd.f32 0.0, %v487
        %489 = vmatprep.mubr.f32.mxu0 0.0
        %490 = vmatmul.mubr.f32.gmra.mrb[0].mxu0 %v372
        %v491 = vpop.f32.mrb[0].mxu0
        %v492 = vadd.f32 0.0, %v491
        %v493 = vpop.f32.mrb[0].mxu0
        %v494 = vadd.f32 0.0, %v493
        %495 = vmatprep.mubr.f32.mxu0 0.0
        %496 = vmatmul.mubr.f32.gmra.mrb[0].mxu0 %v375
        %v497 = vpop.f32.mrb[0].mxu0
        %v498 = vadd.f32 0.0, %v497
        %v499 = vpop.f32.mrb[0].mxu0
        %v500 = vadd.f32 0.0, %v499
        %501 = vmatprep.mubr.f32.mxu0 0.0
        %502 = vmatmul.mubr.f32.gmra.mrb[0].mxu0 %v378
        %v503 = vpop.f32.mrb[0].mxu0
        %v504 = vadd.f32 0.0, %v503
        %v505 = vpop.f32.mrb[0].mxu0
        %v506 = vadd.f32 0.0, %v505
        %507 = vmatprep.mubr.f32.mxu0 0.0
        %508 = vmatmul.mubr.f32.gmra.mrb[0].mxu0 %v381
        %v509 = vpop.f32.mrb[0].mxu0
        %v510 = vadd.f32 0.0, %v509
        %v511 = vpop.f32.mrb[0].mxu0
        %v512 = vadd.f32 0.0, %v511
        %513 = vmatprep.mubr.f32.mxu0 0.0
        %514 = vmatmul.mubr.f32.gmra.mrb[0].mxu0 %v384
        %v515 = vpop.f32.mrb[0].mxu0
        %v516 = vadd.f32 0.0, %v515
        %v517 = vpop.f32.mrb[0].mxu0
        %v518 = vadd.f32 0.0, %v517
        %519 = vmatprep.mubr.f32.mxu0 0.0
        %520 = vmatmul.mubr.f32.gmra.mrb[0].mxu0 %v387
        %v521 = vpop.f32.mrb[0].mxu0
        %v522 = vadd.f32 0.0, %v521
        %v523 = vpop.f32.mrb[0].mxu0
        %v524 = vadd.f32 0.0, %v523
        %525 = vmatprep.mubr.f32.mxu0 0.0
        %526 = vmatmul.mubr.f32.gmra.mrb[0].mxu0 %v390
        %v527 = vpop.f32.mrb[0].mxu0
        %v528 = vadd.f32 0.0, %v527
        %v529 = vpop.f32.mrb[0].mxu0
        %v530 = vadd.f32 0.0, %v529
        %531 = vmatprep.mubr.f32.mxu0 0.0
        %532 = vmatmul.mubr.f32.gmra.mrb[0].mxu0 %v393
        %v533 = vpop.f32.mrb[0].mxu0
        %v534 = vadd.f32 0.0, %v533
        %v535 = vpop.f32.mrb[0].mxu0
        %v536 = vadd.f32 0.0, %v535
        %537 = vmatprep.mubr.f32.mxu0 0.0
        %538 = vmatmul.mubr.f32.gmra.mrb[0].mxu0 %v396
        %v539 = vpop.f32.mrb[0].mxu0
        %v540 = vadd.f32 0.0, %v539
        %v541 = vpop.f32.mrb[0].mxu0
        %v542 = vadd.f32 0.0, %v541
        %543 = vmatprep.mubr.f32.mxu0 0.0
        %544 = vmatmul.mubr.f32.gmra.mrb[0].mxu0 %v399
        %v545 = vpop.f32.mrb[0].mxu0
        %v546 = vadd.f32 0.0, %v545
        %v547 = vpop.f32.mrb[0].mxu0
        %v548 = vadd.f32 0.0, %v547
        %549 = vmatprep.mubr.f32.mxu0 0.0
        %550 = vmatmul.mubr.f32.gmra.mrb[0].mxu0 %v402
        %v551 = vpop.f32.mrb[0].mxu0
        %v552 = vadd.f32 0.0, %v551
        %v553 = vpop.f32.mrb[0].mxu0
        %v554 = vadd.f32 0.0, %v553
        %555 = vmatprep.mubr.f32.mxu0 0.0
        %556 = vmatmul.mubr.f32.gmra.mrb[0].mxu0 %v405
        %v557 = vpop.f32.mrb[0].mxu0
        %v558 = vadd.f32 0.0, %v557
        %v559 = vpop.f32.mrb[0].mxu0
        %v560 = vadd.f32 0.0, %v559
        %561 = vmatprep.mubr.f32.mxu0 0.0
        %562 = vmatmul.mubr.f32.gmra.mrb[0].mxu0 %v408
        %v563 = vpop.f32.mrb[0].mxu0
        %v564 = vadd.f32 0.0, %v563
        %v565 = vpop.f32.mrb[0].mxu0
        %v566 = vadd.f32 0.0, %v565
        %567 = vmatprep.mubr.f32.mxu0 0.0
        %568 = vmatmul.mubr.f32.gmra.mrb[0].mxu0 %v411
        %v569 = vpop.f32.mrb[0].mxu0
        %v570 = vadd.f32 0.0, %v569
        %v571 = vpop.f32.mrb[0].mxu0
        %v572 = vadd.f32 0.0, %v571
        %573 = vdwg.mxu0
        %v574 = vld [vmem:[%s2] sm:$0xff]
        %v575 = vld [vmem:[%s2 + $0x8] sm:$0xff]
        %v576 = vld [vmem:[%s2 + $0x10] sm:$0xff]
        %v577 = vld [vmem:[%s2 + $0x18] sm:$0xff]
        %v578 = vld [vmem:[%s2 + $0x20] sm:$0xff]
        %v579 = vld [vmem:[%s2 + $0x28] sm:$0xff]
        %v580 = vld [vmem:[%s2 + $0x30] sm:$0xff]
        %v581 = vld [vmem:[%s2 + $0x38] sm:$0xff]
        %v582 = vld [vmem:[%s2 + $0x40] sm:$0xff]
        %v583 = vld [vmem:[%s2 + $0x48] sm:$0xff]
        %v584 = vld [vmem:[%s2 + $0x50] sm:$0xff]
        %v585 = vld [vmem:[%s2 + $0x58] sm:$0xff]
        %v586 = vld [vmem:[%s2 + $0x60] sm:$0xff]
        %v587 = vld [vmem:[%s2 + $0x68] sm:$0xff]
        %v588 = vld [vmem:[%s2 + $0x70] sm:$0xff]
        %v589 = vld [vmem:[%s2 + $0x78] sm:$0xff]
        %591 = vset.pattern.permute.xlu0 0
        %592 = vperm.xlu0 %591, %v574
        %v593 = vpop.permute.xlu0 %592
        %596 = vset.pattern.permute.xlu0 0
        %597 = vperm.xlu0 %596, %v575
        %v598 = vpop.permute.xlu0 %597
        %601 = vset.pattern.permute.xlu0 0
        %602 = vperm.xlu0 %601, %v576
        %v603 = vpop.permute.xlu0 %602
        %606 = vset.pattern.permute.xlu0 0
        %607 = vperm.xlu0 %606, %v577
        %v608 = vpop.permute.xlu0 %607
        %611 = vset.pattern.permute.xlu0 0
        %612 = vperm.xlu0 %611, %v578
        %v613 = vpop.permute.xlu0 %612
        %616 = vset.pattern.permute.xlu0 0
        %617 = vperm.xlu0 %616, %v579
        %v618 = vpop.permute.xlu0 %617
        %621 = vset.pattern.permute.xlu0 0
        %622 = vperm.xlu0 %621, %v580
        %v623 = vpop.permute.xlu0 %622
        %626 = vset.pattern.permute.xlu0 0
        %627 = vperm.xlu0 %626, %v581
        %v628 = vpop.permute.xlu0 %627
        %631 = vset.pattern.permute.xlu0 0
        %632 = vperm.xlu0 %631, %v582
        %v633 = vpop.permute.xlu0 %632
        %636 = vset.pattern.permute.xlu0 0
        %637 = vperm.xlu0 %636, %v583
        %v638 = vpop.permute.xlu0 %637
        %641 = vset.pattern.permute.xlu0 0
        %642 = vperm.xlu0 %641, %v584
        %v643 = vpop.permute.xlu0 %642
        %646 = vset.pattern.permute.xlu0 0
        %647 = vperm.xlu0 %646, %v585
        %v648 = vpop.permute.xlu0 %647
        %651 = vset.pattern.permute.xlu0 0
        %652 = vperm.xlu0 %651, %v586
        %v653 = vpop.permute.xlu0 %652
        %656 = vset.pattern.permute.xlu0 0
        %657 = vperm.xlu0 %656, %v587
        %v658 = vpop.permute.xlu0 %657
        %661 = vset.pattern.permute.xlu0 0
        %662 = vperm.xlu0 %661, %v588
        %v663 = vpop.permute.xlu0 %662
        %666 = vset.pattern.permute.xlu0 0
        %667 = vperm.xlu0 %666, %v589
        %v668 = vpop.permute.xlu0 %667
        %vm670 = vcmask 523264
        %v672 = vsel %vm670, %v312, 0
        %v675 = vsel %vm670, %v313, 0
        %v678 = vsel %vm670, %v314, 0
        %v681 = vsel %vm670, %v315, 0
        %v684 = vsel %vm670, %v316, 0
        %v687 = vsel %vm670, %v317, 0
        %v690 = vsel %vm670, %v318, 0
        %v693 = vsel %vm670, %v319, 0
        %v696 = vsel %vm670, %v320, 0
        %v699 = vsel %vm670, %v321, 0
        %v702 = vsel %vm670, %v322, 0
        %v705 = vsel %vm670, %v323, 0
        %v708 = vsel %vm670, %v324, 0
        %v711 = vsel %vm670, %v325, 0
        %v714 = vsel %vm670, %v326, 0
        %v717 = vsel %vm670, %v327, 0
        %719 = vmatprep.subr.mxu0 %v297
        %720 = vmatpush1.msra.mxu0 %v296
        %721 = vmatprep.subr.mxu0 %v299
        %722 = vmatpush1.msra.mxu0 %v298
        %723 = vmatprep.subr.mxu0 %v301
        %724 = vmatpush1.msra.mxu0 %v300
        %725 = vmatprep.subr.mxu0 %v303
        %726 = vmatpush1.msra.mxu0 %v302
        %727 = vmatprep.subr.mxu0 %v305
        %728 = vmatpush1.msra.mxu0 %v304
        %729 = vmatprep.subr.mxu0 %v307
        %730 = vmatpush1.msra.mxu0 %v306
        %731 = vmatprep.subr.mxu0 %v309
        %732 = vmatpush1.msra.mxu0 %v308
        %733 = vmatprep.subr.mxu0 %v311
        %734 = vmatpush1.msra.mxu0 %v310
        %735 = vmatprep.subr.mxu0 0.0
        %736 = vmatpush1.msra.mxu0 0.0
        %737 = vmatprep.subr.mxu0 0.0
        %738 = vmatpush1.msra.mxu0 0.0
        %739 = vmatprep.subr.mxu0 0.0
        %740 = vmatpush1.msra.mxu0 0.0
        %741 = vmatprep.subr.mxu0 0.0
        %742 = vmatpush1.msra.mxu0 0.0
        %743 = vmatprep.subr.mxu0 0.0
        %744 = vmatpush1.msra.mxu0 0.0
        %745 = vmatprep.subr.mxu0 0.0
        %746 = vmatpush1.msra.mxu0 0.0
        %747 = vmatprep.subr.mxu0 0.0
        %748 = vmatpush1.msra.mxu0 0.0
        %749 = vmatprep.subr.mxu0 0.0
        %750 = vmatpush1.msra.mxu0 0.0
        %751 = vmatprep.subr.mxu0 0.0
        %752 = vmatpush1.msra.mxu0 0.0
        %753 = vmatprep.subr.mxu0 0.0
        %754 = vmatpush1.msra.mxu0 0.0
        %755 = vmatprep.subr.mxu0 0.0
        %756 = vmatpush1.msra.mxu0 0.0
        %757 = vmatprep.subr.mxu0 0.0
        %758 = vmatpush1.msra.mxu0 0.0
        %759 = vmatprep.subr.mxu0 0.0
        %760 = vmatpush1.msra.mxu0 0.0
        %761 = vmatprep.subr.mxu0 0.0
        %762 = vmatpush1.msra.mxu0 0.0
        %763 = vmatprep.subr.mxu0 0.0
        %764 = vmatpush1.msra.mxu0 0.0
        %765 = vmatprep.subr.mxu0 0.0
        %766 = vmatpush1.msra.mxu0 0.0
        %767 = vmatprep.subr.mxu0 0.0
        %768 = vmatpush1.msra.mxu0 0.0
        %769 = vmatprep.subr.mxu0 0.0
        %770 = vmatpush1.msra.mxu0 0.0
        %771 = vmatprep.subr.mxu0 0.0
        %772 = vmatpush1.msra.mxu0 0.0
        %773 = vmatprep.subr.mxu0 0.0
        %774 = vmatpush1.msra.mxu0 0.0
        %775 = vmatprep.subr.mxu0 0.0
        %776 = vmatpush1.msra.mxu0 0.0
        %777 = vmatprep.subr.mxu0 0.0
        %778 = vmatpush1.msra.mxu0 0.0
        %779 = vmatprep.subr.mxu0 0.0
        %780 = vmatpush1.msra.mxu0 0.0
        %781 = vmatprep.subr.mxu0 0.0
        %782 = vmatpush1.msra.mxu0 0.0
        %783 = vmatprep.mubr.f32.mxu0 0.0
        %784 = vmatmul.mubr.f32.gmra.mrb[0].mxu0 %v672
        %v785 = vpop.f32.mrb[0].mxu0
        %v786 = vadd.f32 %v593, %v785
        %v787 = vpop.f32.mrb[0].mxu0
        %v788 = vadd.f32 %v593, %v787
        %789 = vmatprep.mubr.f32.mxu0 0.0
        %790 = vmatmul.mubr.f32.gmra.mrb[0].mxu0 %v675
        %v791 = vpop.f32.mrb[0].mxu0
        %v792 = vadd.f32 %v598, %v791
        %v793 = vpop.f32.mrb[0].mxu0
        %v794 = vadd.f32 %v598, %v793
        %795 = vmatprep.mubr.f32.mxu0 0.0
        %796 = vmatmul.mubr.f32.gmra.mrb[0].mxu0 %v678
        %v797 = vpop.f32.mrb[0].mxu0
        %v798 = vadd.f32 %v603, %v797
        %v799 = vpop.f32.mrb[0].mxu0
        %v800 = vadd.f32 %v603, %v799
        %801 = vmatprep.mubr.f32.mxu0 0.0
        %802 = vmatmul.mubr.f32.gmra.mrb[0].mxu0 %v681
        %v803 = vpop.f32.mrb[0].mxu0
        %v804 = vadd.f32 %v608, %v803
        %v805 = vpop.f32.mrb[0].mxu0
        %v806 = vadd.f32 %v608, %v805
        %807 = vmatprep.mubr.f32.mxu0 0.0
        %808 = vmatmul.mubr.f32.gmra.mrb[0].mxu0 %v684
        %v809 = vpop.f32.mrb[0].mxu0
        %v810 = vadd.f32 %v613, %v809
        %v811 = vpop.f32.mrb[0].mxu0
        %v812 = vadd.f32 %v613, %v811
        %813 = vmatprep.mubr.f32.mxu0 0.0
        %814 = vmatmul.mubr.f32.gmra.mrb[0].mxu0 %v687
        %v815 = vpop.f32.mrb[0].mxu0
        %v816 = vadd.f32 %v618, %v815
        %v817 = vpop.f32.mrb[0].mxu0
        %v818 = vadd.f32 %v618, %v817
        %819 = vmatprep.mubr.f32.mxu0 0.0
        %820 = vmatmul.mubr.f32.gmra.mrb[0].mxu0 %v690
        %v821 = vpop.f32.mrb[0].mxu0
        %v822 = vadd.f32 %v623, %v821
        %v823 = vpop.f32.mrb[0].mxu0
        %v824 = vadd.f32 %v623, %v823
        %825 = vmatprep.mubr.f32.mxu0 0.0
        %826 = vmatmul.mubr.f32.gmra.mrb[0].mxu0 %v693
        %v827 = vpop.f32.mrb[0].mxu0
        %v828 = vadd.f32 %v628, %v827
        %v829 = vpop.f32.mrb[0].mxu0
        %v830 = vadd.f32 %v628, %v829
        %831 = vmatprep.mubr.f32.mxu0 0.0
        %832 = vmatmul.mubr.f32.gmra.mrb[0].mxu0 %v696
        %v833 = vpop.f32.mrb[0].mxu0
        %v834 = vadd.f32 %v633, %v833
        %v835 = vpop.f32.mrb[0].mxu0
        %v836 = vadd.f32 %v633, %v835
        %837 = vmatprep.mubr.f32.mxu0 0.0
        %838 = vmatmul.mubr.f32.gmra.mrb[0].mxu0 %v699
        %v839 = vpop.f32.mrb[0].mxu0
        %v840 = vadd.f32 %v638, %v839
        %v841 = vpop.f32.mrb[0].mxu0
        %v842 = vadd.f32 %v638, %v841
        %843 = vmatprep.mubr.f32.mxu0 0.0
        %844 = vmatmul.mubr.f32.gmra.mrb[0].mxu0 %v702
        %v845 = vpop.f32.mrb[0].mxu0
        %v846 = vadd.f32 %v643, %v845
        %v847 = vpop.f32.mrb[0].mxu0
        %v848 = vadd.f32 %v643, %v847
        %849 = vmatprep.mubr.f32.mxu0 0.0
        %850 = vmatmul.mubr.f32.gmra.mrb[0].mxu0 %v705
        %v851 = vpop.f32.mrb[0].mxu0
        %v852 = vadd.f32 %v648, %v851
        %v853 = vpop.f32.mrb[0].mxu0
        %v854 = vadd.f32 %v648, %v853
        %855 = vmatprep.mubr.f32.mxu0 0.0
        %856 = vmatmul.mubr.f32.gmra.mrb[0].mxu0 %v708
        %v857 = vpop.f32.mrb[0].mxu0
        %v858 = vadd.f32 %v653, %v857
        %v859 = vpop.f32.mrb[0].mxu0
        %v860 = vadd.f32 %v653, %v859
        %861 = vmatprep.mubr.f32.mxu0 0.0
        %862 = vmatmul.mubr.f32.gmra.mrb[0].mxu0 %v711
        %v863 = vpop.f32.mrb[0].mxu0
        %v864 = vadd.f32 %v658, %v863
        %v865 = vpop.f32.mrb[0].mxu0
        %v866 = vadd.f32 %v658, %v865
        %867 = vmatprep.mubr.f32.mxu0 0.0
        %868 = vmatmul.mubr.f32.gmra.mrb[0].mxu0 %v714
        %v869 = vpop.f32.mrb[0].mxu0
        %v870 = vadd.f32 %v663, %v869
        %v871 = vpop.f32.mrb[0].mxu0
        %v872 = vadd.f32 %v663, %v871
        %873 = vmatprep.mubr.f32.mxu0 0.0
        %874 = vmatmul.mubr.f32.gmra.mrb[0].mxu0 %v717
        %v875 = vpop.f32.mrb[0].mxu0
        %v876 = vadd.f32 %v668, %v875
        %v877 = vpop.f32.mrb[0].mxu0
        %v878 = vadd.f32 %v668, %v877
        %879 = vdwg.mxu0
        %v880 = vadd.f32 %v786, %v480
        %v881 = vadd.f32 %v788, %v482
        %v882 = vadd.f32 %v792, %v486
        %v883 = vadd.f32 %v794, %v488
        %v884 = vadd.f32 %v798, %v492
        %v885 = vadd.f32 %v800, %v494
        %v886 = vadd.f32 %v804, %v498
        %v887 = vadd.f32 %v806, %v500
        %v888 = vadd.f32 %v810, %v504
        %v889 = vadd.f32 %v812, %v506
        %v890 = vadd.f32 %v816, %v510
        %v891 = vadd.f32 %v818, %v512
        %v892 = vadd.f32 %v822, %v516
        %v893 = vadd.f32 %v824, %v518
        %v894 = vadd.f32 %v828, %v522
        %v895 = vadd.f32 %v830, %v524
        %v896 = vadd.f32 %v834, %v528
        %v897 = vadd.f32 %v836, %v530
        %v898 = vadd.f32 %v840, %v534
        %v899 = vadd.f32 %v842, %v536
        %v900 = vadd.f32 %v846, %v540
        %v901 = vadd.f32 %v848, %v542
        %v902 = vadd.f32 %v852, %v546
        %v903 = vadd.f32 %v854, %v548
        %v904 = vadd.f32 %v858, %v552
        %v905 = vadd.f32 %v860, %v554
        %v906 = vadd.f32 %v864, %v558
        %v907 = vadd.f32 %v866, %v560
        %v908 = vadd.f32 %v870, %v564
        %v909 = vadd.f32 %v872, %v566
        %v910 = vadd.f32 %v876, %v570
        %v911 = vadd.f32 %v878, %v572
        %912 = vst [vmem:[%s273] sm:$0xff] %v880
        %913 = vst [vmem:[%s273 + $0x8] sm:$0xff] %v881
        %914 = vst [vmem:[%s273 + $0x10] sm:$0xff] %v882
        %915 = vst [vmem:[%s273 + $0x18] sm:$0xff] %v883
        %916 = vst [vmem:[%s273 + $0x20] sm:$0xff] %v884
        %917 = vst [vmem:[%s273 + $0x28] sm:$0xff] %v885
        %918 = vst [vmem:[%s273 + $0x30] sm:$0xff] %v886
        %919 = vst [vmem:[%s273 + $0x38] sm:$0xff] %v887
        %920 = vst [vmem:[%s273 + $0x40] sm:$0xff] %v888
        %921 = vst [vmem:[%s273 + $0x48] sm:$0xff] %v889
        %922 = vst [vmem:[%s273 + $0x50] sm:$0xff] %v890
        %923 = vst [vmem:[%s273 + $0x58] sm:$0xff] %v891
        %924 = vst [vmem:[%s273 + $0x60] sm:$0xff] %v892
        %925 = vst [vmem:[%s273 + $0x68] sm:$0xff] %v893
        %926 = vst [vmem:[%s273 + $0x70] sm:$0xff] %v894
        %927 = vst [vmem:[%s273 + $0x78] sm:$0xff] %v895
        %928 = vst [vmem:[%s273 + $0x80] sm:$0xff] %v896
        %929 = vst [vmem:[%s273 + $0x88] sm:$0xff] %v897
        %930 = vst [vmem:[%s273 + $0x90] sm:$0xff] %v898
        %931 = vst [vmem:[%s273 + $0x98] sm:$0xff] %v899
        %932 = vst [vmem:[%s273 + $0xa0] sm:$0xff] %v900
        %933 = vst [vmem:[%s273 + $0xa8] sm:$0xff] %v901
        %934 = vst [vmem:[%s273 + $0xb0] sm:$0xff] %v902
        %935 = vst [vmem:[%s273 + $0xb8] sm:$0xff] %v903
        %936 = vst [vmem:[%s273 + $0xc0] sm:$0xff] %v904
        %937 = vst [vmem:[%s273 + $0xc8] sm:$0xff] %v905
        %938 = vst [vmem:[%s273 + $0xd0] sm:$0xff] %v906
        %939 = vst [vmem:[%s273 + $0xd8] sm:$0xff] %v907
        %940 = vst [vmem:[%s273 + $0xe0] sm:$0xff] %v908
        %941 = vst [vmem:[%s273 + $0xe8] sm:$0xff] %v909
        %942 = vst [vmem:[%s273 + $0xf0] sm:$0xff] %v910
        %943 = vst [vmem:[%s273 + $0xf8] sm:$0xff] %v911
        %s944 = sand.u32 %s163, 1
        %s945 = scalar_lea.sflag [#allocation3], %s944
        %s946 = sand.u32 %s163, 1
        %s947 = smul.addr %s946, 256
        %s948 = scalar_lea.vmem [#allocation2], %s947
        // Predicated region
        $region41: #{tpu_custom_call.1} parent=39 // pred_check
          %p949 = pneg %p173
        $region42: #{tpu_custom_call.1} parent=39 // pred_check_branch
          %951 = sbr.rel (%p949) target = $region44
        $region43: #{tpu_custom_call.1} parent=39 // pred_region
          %s952 = smul.u32 2, %s24
          %s954 = ssub.s32 4096, 4096
          %955 = vsyncadd %s945, %s954
          %s956 = smul.addr %s23, 32
          %s957 = sadd.s32 %s952, %s956
          %s958 = smul.addr %s957, 128
          %s959 = scalar_lea.hbm %s5, %s958
          %s960 = sshll.u32 %s948, 4
          %s961 = int_to_ptr.vmem [resolvable:$true] %s960
          %966 = dma.vmem_to_hbm [thread:$0]  %s961, 4096, %s959, %s945, 256, 256, 16
        $region44: #{tpu_custom_call.1} parent=39 // pred_fallthru
          _
      $region40: #{tpu_custom_call.1} parent=5 // pred_fallthru
        _
      %p967 = scmp.le.s32.totalorder 2, %s14
      // Predicated region
      $region45: #{tpu_custom_call.1} parent=5 // pred_check
        %p968 = pneg %p967
      $region46: #{tpu_custom_call.1} parent=5 // pred_check_branch
        %970 = sbr.rel (%p968) target = $region48
      $region47: #{tpu_custom_call.1} parent=5 // pred_region
        %s971 = ssub.s32 %s14, 2
        // Predicated region
        $region49: #{tpu_custom_call.1} parent=47 // pred_check
          %p972 = pneg %p179
        $region50: #{tpu_custom_call.1} parent=47 // pred_check_branch
          %974 = sbr.rel (%p972) target = $region52
        $region51: #{tpu_custom_call.1} parent=47 // pred_region
          %s975 = sand.u32 %s164, 1
          %s976 = scalar_lea.sflag [#allocation3], %s975
          %s977 = sand.u32 %s164, 1
          %s978 = smul.addr %s977, 256
          %s979 = scalar_lea.vmem [#allocation2], %s978
          %980 = dma.done %s976, 4096
        $region52: #{tpu_custom_call.1} parent=47 // pred_fallthru
          _
      $region48: #{tpu_custom_call.1} parent=5 // pred_fallthru
        _
    $region6: #{tpu_custom_call.1} parent=1 // loop_footer
      %s18 = sadd.s32 1, %s14
    $region7: #{tpu_custom_call.1} parent=1 // loop_footer_branch
      %13 = sbr.rel target = $region3
    $region8: #{tpu_custom_call.1} parent=1 // loop_exit
      _
    %981 = vsyncpa [#allocation3], 1
    %s982 = scalar_lea.sflag [#allocation3], 1
    %983 = vsyncpa %s982, 1

</llo_original>
